<compile_context>
chip_gen: v7x
topology: tpu7x:2x2x1
jax: 0.10.0
libtpu: 0.0.40
codegen_flags: <defaults>
</compile_context>

<pallas_src>
import functools

import jax
import jax.numpy as jnp
from jax.experimental import pallas as pl
from jax.experimental.pallas import tpu as pltpu

IGNORE_INDEX = -1


def _ce_kernel(x_ref, t_ref, sum_ref, cnt_ref, nll_acc, cnt_acc, *, hw):
    """One (batch-slice, pixel-chunk, pixel-tile) step.

    x_ref:   (1, C, TP)      logits block (classes on sublanes, pixels on lanes)
    t_ref:   (1, 1, TP)      int targets (already IGNORE_INDEX where masked out)
    sum_ref: (1, 1, 1, 1)    per-(batch, chunk) NLL sum (written on last tile)
    cnt_ref: (1, 1, 1, 1)    per-(batch, chunk) valid count
    nll_acc: (1, TP)         VMEM scratch lane-wise NLL accumulator
    cnt_acc: (1, TP)         VMEM scratch lane-wise count accumulator
    """
    c_chunk = pl.program_id(1)
    k = pl.program_id(2)
    n_k = pl.num_programs(2)

    @pl.when(k == 0)
    def _():
        nll_acc[...] = jnp.zeros_like(nll_acc)
        cnt_acc[...] = jnp.zeros_like(cnt_acc)

    tp = x_ref.shape[2]
    # Global pixel offset of this tile (handles ragged last tile AND phantom
    # tiles of an odd 2-way chunk split uniformly).
    off = (c_chunk * n_k + k) * tp

    lane = jax.lax.broadcasted_iota(jnp.int32, (1, tp), 1)        # (1, TP)
    lane_ok = (off + lane) < hw                                   # (1, TP) bool

    # Zero out-of-range lanes BEFORE exp/max so garbage can't make Inf/NaN.
    x = jnp.where(lane_ok, x_ref[0].astype(jnp.float32), 0.0)     # (C, TP)
    t = t_ref[0].astype(jnp.int32)                                # (1, TP)

    # Numerically-stable log-sum-exp over the class (sublane) axis.
    mx = jnp.max(x, axis=0, keepdims=True)                                # (1, TP)
    lse = jnp.log(jnp.sum(jnp.exp(x - mx), axis=0, keepdims=True)) + mx   # (1, TP)

    # Logit at target class via a single fused select-reduce over sublanes.
    cls_iota = jax.lax.broadcasted_iota(jnp.int32, x.shape, 0)            # (C, TP)
    logit_t = jnp.sum(jnp.where(cls_iota == t, x, 0.0),
                      axis=0, keepdims=True)                              # (1, TP)

    # valid = in-range lane AND not ignored (mask already folded into t).
    valid = lane_ok & (t != IGNORE_INDEX)                                 # (1, TP)

    nll_acc[...] += jnp.where(valid, lse - logit_t, 0.0)
    cnt_acc[...] += valid.astype(jnp.float32)

    @pl.when(k == n_k - 1)
    def _():
        sum_ref[...] = jnp.reshape(jnp.sum(nll_acc[...]), (1, 1, 1, 1))
        cnt_ref[...] = jnp.reshape(jnp.sum(cnt_acc[...]), (1, 1, 1, 1))


def cross_entropy_loss(inputs_nchw, targets, mask, *, tile_pix=None):
    """inputs_nchw: (N, C, H, W) float; targets: (N, H, W) int; mask: (N, H, W) bool."""
    N, C, H, W = inputs_nchw.shape
    HW = H * W

    # Free reshape — no transpose, no HBM round-trip. Keep input dtype (bf16 ok).
    x = inputs_nchw.reshape(N, C, HW)

    # Fold mask into targets and shrink the target stream (int16 covers
    # C < 32768 plus IGNORE_INDEX = -1); widened to int32 in-kernel.
    t_dtype = jnp.int16 if C < 32768 else jnp.int32
    t = jnp.where(
        mask.reshape(N, HW),
        targets.reshape(N, HW).astype(t_dtype),
        jnp.asarray(IGNORE_INDEX, dtype=t_dtype),
    ).reshape(N, 1, HW)

    itemsize = jnp.dtype(x.dtype).itemsize
    t_itemsize = jnp.dtype(t_dtype).itemsize

    # Per-generation VMEM budget: generous on 128 MiB parts (v5e/v6e),
    # conservative on v7x's 64 MiB per-TC VMEM.
    try:
        vmem_cap = pltpu.get_tpu_info().vmem_capacity_bytes
    except Exception:  # pragma: no cover - conservative fallback
        vmem_cap = 64 * 1024 * 1024
    if vmem_cap >= 100 * 1024 * 1024:      # v5e / v6e (128 MiB VMEM)
        vmem_limit = 96 * 1024 * 1024
        block_budget = 24 * 1024 * 1024
    else:                                  # v7x (64 MiB VMEM per TC)
        vmem_limit = 32 * 1024 * 1024
        block_budget = 8 * 1024 * 1024

    if tile_pix is None:
        # Bytes per pixel-lane live in VMEM:
        #   double-buffered logits + targets input blocks
        # + ~5 single-buffered (C, tile_pix) f32 in-kernel temporaries
        # + 2 lane-wide f32 accumulators.
        per_pix = 2 * (C * itemsize + t_itemsize) + 5 * C * 4 + 2 * 4
        tile_pix = (block_budget // per_pix) // 128 * 128
        tile_pix = int(max(128, min(tile_pix, 32 * 1024)))
    hw_pad128 = pl.cdiv(HW, 128) * 128
    tile_pix = int(min(tile_pix, hw_pad128))

    num_tiles = pl.cdiv(HW, tile_pix)
    # 2-way pixel-chunk split so both TensorCores (v7x) are busy even when
    # N == 1. Phantom tiles (odd split) are clamped + fully masked in-kernel.
    num_chunks = 2 if num_tiles >= 2 else 1
    tiles_per_chunk = pl.cdiv(num_tiles, num_chunks)
    last_tile = num_tiles - 1

    def in_map(n, c, k):
        return (n, 0, jnp.minimum(c * tiles_per_chunk + k, last_tile))

    def out_map(n, c, k):
        return (n, c, 0, 0)

    grid = (N, num_chunks, tiles_per_chunk)
    kernel = functools.partial(_ce_kernel, hw=HW)

    sum_out, cnt_out = pl.pallas_call(
        kernel,
        out_shape=(
            jax.ShapeDtypeStruct((N, num_chunks, 1, 1), jnp.float32),
            jax.ShapeDtypeStruct((N, num_chunks, 1, 1), jnp.float32),
        ),
        grid_spec=pltpu.PrefetchScalarGridSpec(
            num_scalar_prefetch=0,
            grid=grid,
            in_specs=[
                pl.BlockSpec((1, C, tile_pix), in_map),
                pl.BlockSpec((1, 1, tile_pix), in_map),
            ],
            out_specs=[
                pl.BlockSpec((1, 1, 1, 1), out_map),
                pl.BlockSpec((1, 1, 1, 1), out_map),
            ],
            scratch_shapes=[
                pltpu.VMEM((1, tile_pix), jnp.float32),
                pltpu.VMEM((1, tile_pix), jnp.float32),
            ],
        ),
        compiler_params=pltpu.CompilerParams(
            # Batch and pixel-chunk axes can be split across TensorCores;
            # the pixel-tile axis is the sequential reduction axis.
            dimension_semantics=("parallel", "parallel", "arbitrary"),
            vmem_limit_bytes=vmem_limit,
        ),
    )(x, t)

    # size_average=True -> mean over selected, non-ignored pixels.
    # (NaN when zero valid pixels — matches the PyTorch/NLLLoss reference.)
    total = jnp.sum(sum_out)
    count = jnp.sum(cnt_out)
    return (total / count).astype(jnp.float32)


def _reference_loss(inputs_nchw, targets, mask):
    """Pure-JAX reference matching the PyTorch module semantics."""
    N, C, H, W = inputs_nchw.shape
    x = jnp.transpose(inputs_nchw, (0, 2, 3, 1)).reshape(-1, C).astype(jnp.float32)
    t = targets.reshape(-1).astype(jnp.int32)
    m = mask.reshape(-1).astype(bool)
    logp = jax.nn.log_softmax(x, axis=1)
    nll = -jnp.take_along_axis(logp, jnp.clip(t, 0, C - 1)[:, None], axis=1)[:, 0]
    valid = m & (t != IGNORE_INDEX)
    return jnp.sum(jnp.where(valid, nll, 0.0)) / jnp.sum(valid.astype(jnp.float32))


if __name__ == "__main__":
    key = jax.random.PRNGKey(0)
    k1, k2, k3 = jax.random.split(key, 3)

    N, C, H, W = 2, 4, 16, 16
    inputs = jax.random.normal(k1, (N, C, H, W), dtype=jnp.float32)
    targets = jax.random.randint(k2, (N, H, W), minval=-1, maxval=C, dtype=jnp.int32)
    mask = jax.random.bernoulli(k3, p=0.7, shape=(N, H, W))

    loss = cross_entropy_loss(inputs, targets, mask)
    loss = jax.block_until_ready(loss)

    ref = jax.block_until_ready(_reference_loss(inputs, targets, mask))
    assert jnp.allclose(loss, ref, rtol=1e-5, atol=1e-5), (loss, ref)

    print("KERNEL_OK")
</pallas_src>

<mosaic_0001>
module attributes {stable_mosaic.version = 11 : i64} {
  func.func @_ce_kernel(%arg0: i32, %arg1: i32, %arg2: i32, %arg3: memref<1x4x256xf32, #tpu.memory_space<vmem>>, %arg4: memref<1x1x256xi16, #tpu.memory_space<vmem>>, %arg5: memref<1x1x1x1xf32, #tpu.memory_space<vmem>>, %arg6: memref<1x1x1x1xf32, #tpu.memory_space<vmem>>, %arg7: memref<1x256xf32, #tpu.memory_space<vmem>>, %arg8: memref<1x256xf32, #tpu.memory_space<vmem>>) attributes {dimension_semantics = [#tpu.dimension_semantics<parallel>, #tpu.dimension_semantics<parallel>, #tpu.dimension_semantics<arbitrary>], iteration_bounds = array<i64: 2, 1, 1>, scalar_prefetch = 0 : i64, scratch_operands = 2 : i64, tpu.core_type = #tpu.core_type<tc>, window_params = [{transform_indices = @transform_0, window_bounds = array<i64: 1, 4, 256>}, {transform_indices = @transform_1, window_bounds = array<i64: 1, 1, 256>}, {transform_indices = @transform_2, window_bounds = array<i64: 1, 1, 1, 1>}, {transform_indices = @transform_3, window_bounds = array<i64: 1, 1, 1, 1>}]} {
    %c0_i32 = arith.constant 0 : i32
    %0 = arith.cmpi eq, %arg2, %c0_i32 : i32
    %1 = arith.extui %0 : i1 to i32
    %c0_i32_0 = arith.constant 0 : i32
    %2 = arith.cmpi ne, %1, %c0_i32_0 : i32
    scf.if %2 {
      %cst_22 = arith.constant 0.000000e+00 : f32
      %53 = vector.broadcast %cst_22 : f32 to vector<1x256xf32>
      %c0_23 = arith.constant 0 : index
      %c0_24 = arith.constant 0 : index
      %54 = vector.load %arg7[%c0_23, %c0_24] : memref<1x256xf32, #tpu.memory_space<vmem>>, vector<1x256xf32>
      tpu.vector_store %arg7[%c0_23, %c0_24], %53 {strides = array<i32>} : memref<1x256xf32, #tpu.memory_space<vmem>>, vector<1x256xf32>,
      %cst_25 = arith.constant 0.000000e+00 : f32
      %55 = vector.broadcast %cst_25 : f32 to vector<1x256xf32>
      %c0_26 = arith.constant 0 : index
      %c0_27 = arith.constant 0 : index
      %56 = vector.load %arg8[%c0_26, %c0_27] : memref<1x256xf32, #tpu.memory_space<vmem>>, vector<1x256xf32>
      tpu.vector_store %arg8[%c0_26, %c0_27], %55 {strides = array<i32>} : memref<1x256xf32, #tpu.memory_space<vmem>>, vector<1x256xf32>,
    } else {
    }
    %c1_i32 = arith.constant 1 : i32
    %3 = arith.muli %arg1, %c1_i32 : i32
    %4 = arith.addi %3, %arg2 : i32
    %c256_i32 = arith.constant 256 : i32
    %5 = arith.muli %4, %c256_i32 : i32
    %6 = tpu.iota {dimensions = array<i32: 1>} : vector<1x256xi32>
    %7 = vector.broadcast %5 : i32 to vector<1x256xi32>
    %8 = arith.addi %7, %6 : vector<1x256xi32>
    %c256_i32_1 = arith.constant 256 : i32
    %9 = vector.broadcast %c256_i32_1 : i32 to vector<1x256xi32>
    %10 = arith.cmpi slt, %8, %9 : vector<1x256xi32>
    %c0 = arith.constant 0 : index
    %c0_2 = arith.constant 0 : index
    %c0_3 = arith.constant 0 : index
    %11 = vector.load %arg3[%c0, %c0_2, %c0_3] : memref<1x4x256xf32, #tpu.memory_space<vmem>>, vector<1x4x256xf32>
    %12 = vector.shape_cast %11 : vector<1x4x256xf32> to vector<4x256xf32>
    %cst = arith.constant 0.000000e+00 : f32
    %13 = vector.shape_cast %10 : vector<1x256xi1> to vector<1x256xi1>
    %14 = vector.broadcast %13 : vector<1x256xi1> to vector<4x256xi1>
    %15 = vector.broadcast %cst : f32 to vector<4x256xf32>
    %16 = arith.select %14, %12, %15 : vector<4x256xi1>, vector<4x256xf32>
    %c0_4 = arith.constant 0 : index
    %c0_5 = arith.constant 0 : index
    %c0_6 = arith.constant 0 : index
    %17 = vector.load %arg4[%c0_4, %c0_5, %c0_6] : memref<1x1x256xi16, #tpu.memory_space<vmem>>, vector<1x1x256xi16>
    %18 = vector.shape_cast %17 : vector<1x1x256xi16> to vector<1x256xi16>
    %19 = arith.extsi %18 : vector<1x256xi16> to vector<1x256xi32>
    %cst_7 = arith.constant dense<0xFF800000> : vector<256xf32>
    %20 = vector.multi_reduction <maximumf>, %16, %cst_7 [0] : vector<4x256xf32> to vector<256xf32>
    %21 = vector.shape_cast %20 : vector<256xf32> to vector<1x256xf32>
    %22 = vector.broadcast %21 : vector<1x256xf32> to vector<4x256xf32>
    %23 = arith.subf %16, %22 : vector<4x256xf32>
    %24 = math.exp %23 : vector<4x256xf32>
    %cst_8 = arith.constant dense<0.000000e+00> : vector<256xf32>
    %25 = vector.multi_reduction <add>, %24, %cst_8 [0] : vector<4x256xf32> to vector<256xf32>
    %26 = vector.shape_cast %25 : vector<256xf32> to vector<1x256xf32>
    %27 = math.log %26 : vector<1x256xf32>
    %28 = arith.addf %27, %21 : vector<1x256xf32>
    %29 = tpu.iota {dimensions = array<i32: 0>} : vector<4x256xi32>
    %30 = vector.broadcast %19 : vector<1x256xi32> to vector<4x256xi32>
    %31 = arith.cmpi eq, %29, %30 : vector<4x256xi32>
    %cst_9 = arith.constant 0.000000e+00 : f32
    %32 = vector.broadcast %cst_9 : f32 to vector<4x256xf32>
    %33 = arith.select %31, %16, %32 : vector<4x256xi1>, vector<4x256xf32>
    %cst_10 = arith.constant dense<0.000000e+00> : vector<256xf32>
    %34 = vector.multi_reduction <add>, %33, %cst_10 [0] : vector<4x256xf32> to vector<256xf32>
    %35 = vector.shape_cast %34 : vector<256xf32> to vector<1x256xf32>
    %c-1_i32 = arith.constant -1 : i32
    %36 = vector.broadcast %c-1_i32 : i32 to vector<1x256xi32>
    %37 = arith.cmpi ne, %19, %36 : vector<1x256xi32>
    %38 = arith.andi %10, %37 : vector<1x256xi1>
    %c0_11 = arith.constant 0 : index
    %c0_12 = arith.constant 0 : index
    %39 = vector.load %arg7[%c0_11, %c0_12] : memref<1x256xf32, #tpu.memory_space<vmem>>, vector<1x256xf32>
    %40 = arith.subf %28, %35 : vector<1x256xf32>
    %cst_13 = arith.constant 0.000000e+00 : f32
    %41 = vector.broadcast %cst_13 : f32 to vector<1x256xf32>
    %42 = arith.select %38, %40, %41 : vector<1x256xi1>, vector<1x256xf32>
    %43 = arith.addf %39, %42 : vector<1x256xf32>
    %c0_14 = arith.constant 0 : index
    %c0_15 = arith.constant 0 : index
    %44 = vector.load %arg7[%c0_14, %c0_15] : memref<1x256xf32, #tpu.memory_space<vmem>>, vector<1x256xf32>
    tpu.vector_store %arg7[%c0_14, %c0_15], %43 {strides = array<i32>} : memref<1x256xf32, #tpu.memory_space<vmem>>, vector<1x256xf32>,
    %c0_16 = arith.constant 0 : index
    %c0_17 = arith.constant 0 : index
    %45 = vector.load %arg8[%c0_16, %c0_17] : memref<1x256xf32, #tpu.memory_space<vmem>>, vector<1x256xf32>
    %46 = arith.extui %38 : vector<1x256xi1> to vector<1x256xi32>
    %47 = arith.sitofp %46 : vector<1x256xi32> to vector<1x256xf32>
    %48 = arith.addf %45, %47 : vector<1x256xf32>
    %c0_18 = arith.constant 0 : index
    %c0_19 = arith.constant 0 : index
    %49 = vector.load %arg8[%c0_18, %c0_19] : memref<1x256xf32, #tpu.memory_space<vmem>>, vector<1x256xf32>
    tpu.vector_store %arg8[%c0_18, %c0_19], %48 {strides = array<i32>} : memref<1x256xf32, #tpu.memory_space<vmem>>, vector<1x256xf32>,
    %c0_i32_20 = arith.constant 0 : i32
    %50 = arith.cmpi eq, %arg2, %c0_i32_20 : i32
    %51 = arith.extui %50 : i1 to i32
    %c0_i32_21 = arith.constant 0 : i32
    %52 = arith.cmpi ne, %51, %c0_i32_21 : i32
    scf.if %52 {
      %c0_22 = arith.constant 0 : index
      %c0_23 = arith.constant 0 : index
      %53 = vector.load %arg7[%c0_22, %c0_23] : memref<1x256xf32, #tpu.memory_space<vmem>>, vector<1x256xf32>
      %54 = vector.shape_cast %53 : vector<1x256xf32> to vector<1x1x256xf32>
      %cst_24 = arith.constant dense<0.000000e+00> : vector<1xf32>
      %55 = vector.multi_reduction <add>, %54, %cst_24 [1, 2] : vector<1x1x256xf32> to vector<1xf32>
      %56 = vector.shape_cast %55 : vector<1xf32> to vector<1x1x1xf32>
      %57 = vector.extract %56[0, 0, 0] : f32 from vector<1x1x1xf32>
      %58 = vector.broadcast %57 : f32 to vector<1x1x1x1xf32>
      %c0_25 = arith.constant 0 : index
      %c0_26 = arith.constant 0 : index
      %c0_27 = arith.constant 0 : index
      %c0_28 = arith.constant 0 : index
      %59 = vector.load %arg5[%c0_25, %c0_26, %c0_27, %c0_28] : memref<1x1x1x1xf32, #tpu.memory_space<vmem>>, vector<1x1x1x1xf32>
      tpu.vector_store %arg5[%c0_25, %c0_26, %c0_27, %c0_28], %58 {strides = array<i32>} : memref<1x1x1x1xf32, #tpu.memory_space<vmem>>, vector<1x1x1x1xf32>,
      %c0_29 = arith.constant 0 : index
      %c0_30 = arith.constant 0 : index
      %60 = vector.load %arg8[%c0_29, %c0_30] : memref<1x256xf32, #tpu.memory_space<vmem>>, vector<1x256xf32>
      %61 = vector.shape_cast %60 : vector<1x256xf32> to vector<1x1x256xf32>
      %cst_31 = arith.constant dense<0.000000e+00> : vector<1xf32>
      %62 = vector.multi_reduction <add>, %61, %cst_31 [1, 2] : vector<1x1x256xf32> to vector<1xf32>
      %63 = vector.shape_cast %62 : vector<1xf32> to vector<1x1x1xf32>
      %64 = vector.extract %63[0, 0, 0] : f32 from vector<1x1x1xf32>
      %65 = vector.broadcast %64 : f32 to vector<1x1x1x1xf32>
      %c0_32 = arith.constant 0 : index
      %c0_33 = arith.constant 0 : index
      %c0_34 = arith.constant 0 : index
      %c0_35 = arith.constant 0 : index
      %66 = vector.load %arg6[%c0_32, %c0_33, %c0_34, %c0_35] : memref<1x1x1x1xf32, #tpu.memory_space<vmem>>, vector<1x1x1x1xf32>
      tpu.vector_store %arg6[%c0_32, %c0_33, %c0_34, %c0_35], %65 {strides = array<i32>} : memref<1x1x1x1xf32, #tpu.memory_space<vmem>>, vector<1x1x1x1xf32>,
    } else {
    }
    return
  }
  func.func @transform_0(%arg0: i32, %arg1: i32, %arg2: i32) -> (i32, i32, i32) {
    %c1_i32 = arith.constant 1 : i32
    %0 = arith.muli %arg1, %c1_i32 : i32
    %1 = arith.addi %0, %arg2 : i32
    %c0_i32 = arith.constant 0 : i32
    %2 = arith.minsi %1, %c0_i32 : i32
    %c0_i32_0 = arith.constant 0 : i32
    %c0_i32_1 = arith.constant 0 : i32
    return %arg0, %c0_i32_0, %2 : i32, i32, i32
  }
  func.func @transform_1(%arg0: i32, %arg1: i32, %arg2: i32) -> (i32, i32, i32) {
    %c1_i32 = arith.constant 1 : i32
    %0 = arith.muli %arg1, %c1_i32 : i32
    %1 = arith.addi %0, %arg2 : i32
    %c0_i32 = arith.constant 0 : i32
    %2 = arith.minsi %1, %c0_i32 : i32
    %c0_i32_0 = arith.constant 0 : i32
    %c0_i32_1 = arith.constant 0 : i32
    return %arg0, %c0_i32_0, %2 : i32, i32, i32
  }
  func.func @transform_2(%arg0: i32, %arg1: i32, %arg2: i32) -> (i32, i32, i32, i32) {
    %c0_i32 = arith.constant 0 : i32
    %c0_i32_0 = arith.constant 0 : i32
    %c0_i32_1 = arith.constant 0 : i32
    return %arg0, %arg1, %c0_i32, %c0_i32_0 : i32, i32, i32, i32
  }
  func.func @transform_3(%arg0: i32, %arg1: i32, %arg2: i32) -> (i32, i32, i32, i32) {
    %c0_i32 = arith.constant 0 : i32
    %c0_i32_0 = arith.constant 0 : i32
    %c0_i32_1 = arith.constant 0 : i32
    return %arg0, %arg1, %c0_i32, %c0_i32_0 : i32, i32, i32, i32
  }
}

</mosaic_0001>

<llo_original>
// kernel: tpu_custom_call.1
$region0: #{tpu_custom_call.1}
  #allocation0 [shape = 'u32[]', space=smem, size = 0x4, offset = 0x4, fixed_abs, tag = 'smem constant byte address 0x4 - core index']
  #allocation1 [shape = 'u32[144,128]{1,0:T(1,128)}', space=vmem, size = 0x12000, scoped, tag = 'internal scratch']
  #allocation2 [shape = 'f32[1,256]{1,0:T(1,128)}', space=vmem, size = 0x400, scoped, tag = 'scratch operand']
  #allocation3 [shape = 'f32[1,256]{1,0:T(1,128)}', space=vmem, size = 0x400, scoped, tag = 'scratch operand']
  %s0 = inlined_call_operand.hbm [shape: f32[2,4,256], index: 0, kind: input, shape index: {}]
  %s1 = inlined_call_operand.vmem [shape: s16[2,1,256], index: 1, kind: input, shape index: {}]
  %s2 = inlined_call_operand.vmem [shape: f32[2,1,1,1], index: 2, kind: output, shape index: {0}]
  %s3 = inlined_call_operand.vmem [shape: f32[2,1,1,1], index: 3, kind: output, shape index: {1}]
  %4 = xla_tuple %s2, %s3
  %s5 = sld [smem:[#allocation0]]
  $region61: #{tpu_custom_call.1} parent=0
    _
  %s7 = ssub.s32 1, %s5
  %s8 = scalar_select 0, %s7, %s5
  $region1: #{tpu_custom_call.1} parent=0
    #allocation4 [shape = 'u8[8192]{0}', space=vmem, size = 0x2000, scoped, tag = 'input window, operand 0']
    #allocation5 [shape = 's32[2]{0}', space=sflag, size = 0x8, scoped, tag = 'scoped memory for tpu_custom_call.1']
    %9 = vsyncpa [#allocation5], 0
    %s10 = scalar_lea.sflag [#allocation5], 1
    %11 = vsyncpa %s10, 0
    loop: start=0, step=1, limit=4
    $region2: #{tpu_custom_call.1} parent=1 // loop_pre_header
      _
    $region3: #{tpu_custom_call.1} parent=1 // loop_header
      %s13 = sphi 0, %s17
      %p14 = scmp.ge.s32.totalorder %s13, 4
      %s20 = sphi 0, %s39
      %s21 = sphi 0, %s35
      %s22 = sphi 0, %s31
      %s23 = sphi 0, %s20
      %s24 = sphi 0, %s21
      %s25 = sphi 0, %s22
      %s26 = sphi 0, %s23
      %s27 = sphi 0, %s24
      %s28 = sphi 0, %s25
      %s50 = sphi 0, %s52
      %s53 = sphi 0, %s50
      %s54 = sphi 0, %s53
      %s70 = sphi 0, %s54
      %s84 = sphi 0, %s86
      %s87 = sphi 0, %s84
      %s88 = sphi 0, %s87
      %s104 = sphi 0, %s88
      %s112 = sphi 0, %s114
      %s115 = sphi 0, %s112
      %s116 = sphi 0, %s115
      %s132 = sphi 0, %s116
      %s140 = sphi 0, %s142
      %s143 = sphi 0, %s140
      %s144 = sphi 0, %s143
      %s160 = sphi 0, %s144
    $region4: #{tpu_custom_call.1} parent=1 // loop_header_branch
      %16 = sbr.rel (%p14) target = $region8
    $region5: #{tpu_custom_call.1} parent=1 // loop_body
      %s18 = ssub.s32 %s13, 1
      %s19 = ssub.s32 %s13, 2
      %s29 = sadd.s32 1, %s22
      %p30 = scmp.ge.s32.totalorder %s29, 1
      %s31 = scalar_select %p30, 0, %s29
      %s32 = sadd.s32 1, %s21
      %s33 = scalar_select %p30, %s32, %s21
      %p34 = scmp.ge.s32.totalorder %s33, 1
      %s35 = scalar_select %p34, 0, %s33
      %s36 = sadd.s32 1, %s20
      %s37 = scalar_select %p34, %s36, %s20
      %p38 = scmp.ge.s32.totalorder %s37, 2
      %s39 = scalar_select %p38, 0, %s37
      %s40 = sadd.s32 %s21, %s22
      %p41 = scmp.lt.s32.totalorder %s40, 0
      %s42 = scalar_select %p41, %s40, 0
      %s43 = sadd.s32 %s35, %s31
      %p44 = scmp.lt.s32.totalorder %s43, 0
      %s45 = scalar_select %p44, %s43, 0
      %s46 = ssub.s32 %s20, %s39
      %s47 = ssub.s32 %s42, %s45
      %s48 = sor.u32 %s46, %s47
      %p49 = scmp.eq.s32.totalorder %s48, 0
      %s51 = sadd.s32 %s50, 1
      %s52 = scalar_select %p49, %s50, %s51
      %p55 = pneg %p49
      %p56 = scmp.eq.s32.totalorder %s13, 1
      %p57 = por %p55, %p56
      %p58 = scmp.ne.s32.totalorder %s50, %s53
      %p59 = scmp.eq.s32.totalorder %s13, 0
      %p60 = por %p58, %p59
      %p61 = scmp.ne.s32.totalorder %s50, %s53
      %p62 = scmp.eq.s32.totalorder %s18, 1
      %p63 = por %p61, %p62
      %p64 = scmp.ne.s32.totalorder %s53, %s54
      %p65 = scmp.eq.s32.totalorder %s18, 0
      %p66 = por %p64, %p65
      %p67 = scmp.ne.s32.totalorder %s53, %s54
      %p68 = scmp.eq.s32.totalorder %s19, 1
      %p69 = por %p67, %p68
      %p71 = scmp.ne.s32.totalorder %s54, %s70
      %p72 = scmp.eq.s32.totalorder %s19, 0
      %p73 = por %p71, %p72
      %s74 = sadd.s32 %s21, %s22
      %p75 = scmp.lt.s32.totalorder %s74, 0
      %s76 = scalar_select %p75, %s74, 0
      %s77 = sadd.s32 %s35, %s31
      %p78 = scmp.lt.s32.totalorder %s77, 0
      %s79 = scalar_select %p78, %s77, 0
      %s80 = ssub.s32 %s20, %s39
      %s81 = ssub.s32 %s76, %s79
      %s82 = sor.u32 %s80, %s81
      %p83 = scmp.eq.s32.totalorder %s82, 0
      %s85 = sadd.s32 %s84, 1
      %s86 = scalar_select %p83, %s84, %s85
      %p89 = pneg %p83
      %p90 = scmp.eq.s32.totalorder %s13, 1
      %p91 = por %p89, %p90
      %p92 = scmp.ne.s32.totalorder %s84, %s87
      %p93 = scmp.eq.s32.totalorder %s13, 0
      %p94 = por %p92, %p93
      %p95 = scmp.ne.s32.totalorder %s84, %s87
      %p96 = scmp.eq.s32.totalorder %s18, 1
      %p97 = por %p95, %p96
      %p98 = scmp.ne.s32.totalorder %s87, %s88
      %p99 = scmp.eq.s32.totalorder %s18, 0
      %p100 = por %p98, %p99
      %p101 = scmp.ne.s32.totalorder %s87, %s88
      %p102 = scmp.eq.s32.totalorder %s19, 1
      %p103 = por %p101, %p102
      %p105 = scmp.ne.s32.totalorder %s88, %s104
      %p106 = scmp.eq.s32.totalorder %s19, 0
      %p107 = por %p105, %p106
      %s108 = ssub.s32 %s20, %s39
      %s109 = ssub.s32 %s21, %s35
      %s110 = sor.u32 %s108, %s109
      %p111 = scmp.eq.s32.totalorder %s110, 0
      %s113 = sadd.s32 %s112, 1
      %s114 = scalar_select %p111, %s112, %s113
      %p117 = pneg %p111
      %p118 = scmp.eq.s32.totalorder %s13, 1
      %p119 = por %p117, %p118
      %p120 = scmp.ne.s32.totalorder %s112, %s115
      %p121 = scmp.eq.s32.totalorder %s13, 0
      %p122 = por %p120, %p121
      %p123 = scmp.ne.s32.totalorder %s112, %s115
      %p124 = scmp.eq.s32.totalorder %s18, 1
      %p125 = por %p123, %p124
      %p126 = scmp.ne.s32.totalorder %s115, %s116
      %p127 = scmp.eq.s32.totalorder %s18, 0
      %p128 = por %p126, %p127
      %p129 = scmp.ne.s32.totalorder %s115, %s116
      %p130 = scmp.eq.s32.totalorder %s19, 1
      %p131 = por %p129, %p130
      %p133 = scmp.ne.s32.totalorder %s116, %s132
      %p134 = scmp.eq.s32.totalorder %s19, 0
      %p135 = por %p133, %p134
      %s136 = ssub.s32 %s20, %s39
      %s137 = ssub.s32 %s21, %s35
      %s138 = sor.u32 %s136, %s137
      %p139 = scmp.eq.s32.totalorder %s138, 0
      %s141 = sadd.s32 %s140, 1
      %s142 = scalar_select %p139, %s140, %s141
      %p145 = pneg %p139
      %p146 = scmp.eq.s32.totalorder %s13, 1
      %p147 = por %p145, %p146
      %p148 = scmp.ne.s32.totalorder %s140, %s143
      %p149 = scmp.eq.s32.totalorder %s13, 0
      %p150 = por %p148, %p149
      %p151 = scmp.ne.s32.totalorder %s140, %s143
      %p152 = scmp.eq.s32.totalorder %s18, 1
      %p153 = por %p151, %p152
      %p154 = scmp.ne.s32.totalorder %s143, %s144
      %p155 = scmp.eq.s32.totalorder %s18, 0
      %p156 = por %p154, %p155
      %p157 = scmp.ne.s32.totalorder %s143, %s144
      %p158 = scmp.eq.s32.totalorder %s19, 1
      %p159 = por %p157, %p158
      %p161 = scmp.ne.s32.totalorder %s144, %s160
      %p162 = scmp.eq.s32.totalorder %s19, 0
      %p163 = por %p161, %p162
      %p164 = scmp.le.s32.totalorder 1, %s13
      %p165 = scmp.lt.s32.totalorder %s13, 3
      %p166 = pnand %p164, %p165
      %p167 = pneg %p166
      // Predicated region
      $region9: #{tpu_custom_call.1} parent=5 // pred_check
        _
      $region10: #{tpu_custom_call.1} parent=5 // pred_check_branch
        %169 = sbr.rel (%p166) target = $region12
      $region11: #{tpu_custom_call.1} parent=5 // pred_region
        %s170 = ssub.s32 %s13, 1
      $region12: #{tpu_custom_call.1} parent=5 // pred_fallthru
        _
      %p171 = scmp.lt.s32.totalorder %s13, 2
      // Predicated region
      $region13: #{tpu_custom_call.1} parent=5 // pred_check
        %p172 = pneg %p171
      $region14: #{tpu_custom_call.1} parent=5 // pred_check_branch
        %174 = sbr.rel (%p172) target = $region16
      $region15: #{tpu_custom_call.1} parent=5 // pred_region
        // Predicated region
        $region17: #{tpu_custom_call.1} parent=15 // pred_check
          %p175 = pneg %p60
        $region18: #{tpu_custom_call.1} parent=15 // pred_check_branch
          %177 = sbr.rel (%p175) target = $region20
        $region19: #{tpu_custom_call.1} parent=15 // pred_region
          %s178 = sand.u32 %s50, 1
          %s179 = scalar_lea.sflag [#allocation5], %s178
          %s180 = sand.u32 %s50, 1
          %s181 = smul.addr %s180, 8
          %s182 = scalar_lea.vmem [#allocation4], %s181
          %s183 = sadd.s32 %s21, %s22
          %p184 = scmp.lt.s32.totalorder %s183, 0
          %s185 = scalar_select %p184, %s183, 0
          %s186 = smul.u32 2, %s185
          %s188 = ssub.s32 128, 128
          %189 = vsyncadd %s179, %s188
          %s190 = smul.addr %s20, 2
          %s191 = sadd.s32 %s186, %s190
          %s192 = smul.addr %s191, 64
          %s193 = scalar_lea.hbm %s0, %s192
          %s195 = sshll.u32 %s182, 4
          %s196 = int_to_ptr.vmem [resolvable:$true] %s195
          %198 = dma.hbm_to_vmem [thread:$0]  %s193, 128, %s196, %s179
        $region20: #{tpu_custom_call.1} parent=15 // pred_fallthru
          _
        // Predicated region
        $region21: #{tpu_custom_call.1} parent=15 // pred_check
          %p199 = pneg %p94
        $region22: #{tpu_custom_call.1} parent=15 // pred_check_branch
          %201 = sbr.rel (%p199) target = $region24
        $region23: #{tpu_custom_call.1} parent=15 // pred_region
          %s202 = sadd.s32 %s21, %s22
          %p203 = scmp.lt.s32.totalorder %s202, 0
          %s204 = scalar_select %p203, %s202, 0
          %s205 = smul.u32 2, %s204
          %p206 = scmp.lt.s32.totalorder %s20, 1
          %s207 = scalar_select %p206, %s20, 1
          %p208 = scmp.lt.s32.totalorder %s205, 1
          %s209 = scalar_select %p208, %s205, 1
          %s210 = smul.addr %s207, 2
          %s211 = sadd.s32 %s209, %s210
          %s212 = scalar_lea.vmem %s1, %s211
          %s213 = sadd.s32 %s21, %s22
          %p214 = scmp.lt.s32.totalorder %s213, 0
          %s215 = scalar_select %p214, %s213, 0
          %s216 = smul.u32 2, %s215
        $region24: #{tpu_custom_call.1} parent=15 // pred_fallthru
          _
      $region16: #{tpu_custom_call.1} parent=5 // pred_fallthru
        _
      %p217 = scmp.le.s32.totalorder 1, %s13
      %p218 = scmp.lt.s32.totalorder %s13, 3
      %p219 = pnand %p217, %p218
      %p220 = pneg %p219
      // Predicated region
      $region25: #{tpu_custom_call.1} parent=5 // pred_check
        _
      $region26: #{tpu_custom_call.1} parent=5 // pred_check_branch
        %222 = sbr.rel (%p219) target = $region28
      $region27: #{tpu_custom_call.1} parent=5 // pred_region
        %s223 = ssub.s32 %s13, 1
        %s224 = sand.u32 %s53, 1
        %s225 = scalar_lea.sflag [#allocation5], %s224
        %s226 = sand.u32 %s53, 1
        %s227 = smul.addr %s226, 8
        %s228 = scalar_lea.vmem [#allocation4], %s227
        // Predicated region
        $region29: #{tpu_custom_call.1} parent=27 // pred_check
          %p229 = pneg %p66
        $region30: #{tpu_custom_call.1} parent=27 // pred_check_branch
          %231 = sbr.rel (%p229) target = $region32
        $region31: #{tpu_custom_call.1} parent=27 // pred_region
          %232 = dma.done %s225, 128
        $region32: #{tpu_custom_call.1} parent=27 // pred_fallthru
          _
        %s233 = sand.u32 %s53, 1
        %s234 = scalar_lea.sflag [#allocation5], %s233
        %s235 = sand.u32 %s53, 1
        %s236 = smul.addr %s235, 8
        %s237 = scalar_lea.vmem [#allocation4], %s236
        %p238 = pneg %p66
        %p239 = pneg %p63
        %s240 = sadd.s32 %s24, %s25
        %p241 = scmp.lt.s32.totalorder %s240, 0
        %s242 = scalar_select %p241, %s240, 0
        %s243 = smul.u32 2, %s242
        %p244 = scmp.lt.s32.totalorder %s23, 1
        %s245 = scalar_select %p244, %s23, 1
        %p246 = scmp.lt.s32.totalorder %s243, 1
        %s247 = scalar_select %p246, %s243, 1
        %s248 = smul.addr %s245, 2
        %s249 = sadd.s32 %s247, %s248
        %s250 = scalar_lea.vmem %s1, %s249
        %p251 = pneg %p100
        %p252 = pneg %p97
        %p253 = pneg %p128
        %p254 = pneg %p125
        %p255 = scmp.lt.s32.totalorder %s23, 1
        %s256 = scalar_select %p255, %s23, 1
        %p257 = scmp.lt.s32.totalorder %s24, 0
        %s258 = scalar_select %p257, %s24, 0
        %s259 = sadd.s32 %s258, %s256
        %s260 = scalar_lea.vmem %s2, %s259
        %p261 = pneg %p156
        %p262 = pneg %p153
        %p263 = scmp.lt.s32.totalorder %s23, 1
        %s264 = scalar_select %p263, %s23, 1
        %p265 = scmp.lt.s32.totalorder %s24, 0
        %s266 = scalar_select %p265, %s24, 0
        %s267 = sadd.s32 %s266, %s264
        %s268 = scalar_lea.vmem %s3, %s267
        %s269 = sadd.s32 %s24, %s25
        %p270 = scmp.lt.s32.totalorder %s269, 0
        %s271 = scalar_select %p270, %s269, 0
        %s272 = smul.u32 2, %s271
        %s273 = sadd.s32 %s24, %s25
        %p274 = scmp.lt.s32.totalorder %s273, 0
        %s275 = scalar_select %p274, %s273, 0
        %s276 = smul.u32 2, %s275
        %p277 = scmp.lt.s32.totalorder %s23, 1
        %s278 = scalar_select %p277, %s23, 1
        %p279 = scmp.lt.s32.totalorder %s276, 1
        %s280 = scalar_select %p279, %s276, 1
        %s281 = smul.addr %s278, 2
        %s282 = sadd.s32 %s280, %s281
        %s283 = scalar_lea.vmem %s1, %s282
        %s284 = sadd.s32 %s24, %s25
        %p285 = scmp.lt.s32.totalorder %s284, 0
        %s286 = scalar_select %p285, %s284, 0
        %s287 = smul.u32 2, %s286
        %p288 = scmp.lt.s32.totalorder %s23, 1
        %s289 = scalar_select %p288, %s23, 1
        %p290 = scmp.lt.s32.totalorder %s24, 0
        %s291 = scalar_select %p290, %s24, 0
        %s292 = sadd.s32 %s291, %s289
        %s293 = scalar_lea.vmem %s2, %s292
        %p294 = scmp.lt.s32.totalorder %s23, 1
        %s295 = scalar_select %p294, %s23, 1
        %p296 = scmp.lt.s32.totalorder %s24, 0
        %s297 = scalar_select %p296, %s24, 0
        %s298 = sadd.s32 %s297, %s295
        %s299 = scalar_lea.vmem %s3, %s298
        %p300 = scmp.eq.s32.totalorder %s25, 0
        // Predicated region
        $region33: #{tpu_custom_call.1} parent=27 // pred_check
          %p301 = pneg %p300
        $region34: #{tpu_custom_call.1} parent=27 // pred_check_branch
          %303 = sbr.rel (%p301) target = $region36
        $region35: #{tpu_custom_call.1} parent=27 // pred_region
          %v304 = vlaneseq
          %vm305 = vcmp.ge.s32.totalorder %v304, 0
          %vm306 = vcmp.lt.s32.totalorder %v304, 256
          %vm307 = vmand %vm305, %vm306
          %308 = vst.msk [vmem:[#allocation2] sm:$0x3] %vm307, 0.0
          %309 = vst.msk [vmem:[#allocation3] sm:$0x3] %vm307, 0.0
        $region36: #{tpu_custom_call.1} parent=27 // pred_fallthru
          _
        %s310 = sadd.s32 %s24, %s25
        %s311 = smul.u32 %s310, 256
        %v312 = vlaneseq
        %v313 = vand.u32 %v312, 127
        %v314 = vadd.s32 %v313, 128
        %v315 = vstv %s311
        %v316 = vadd.s32 %v315, %v313
        %v317 = vadd.s32 %v315, %v314
        %vm318 = vcmp.lt.s32.totalorder %v316, 256
        %vm319 = vcmp.lt.s32.totalorder %v317, 256
        %v320 = vld [vmem:[%s228] sm:$0xff]
        %v321 = vsel %vm318, 1, 0
        %v322 = vsel %vm319, 1, 0
        %vm323 = vcmp.eq.s32.totalorder %v321, 1
        %vm324 = vcmp.eq.s32.totalorder %v322, 1
        %v326 = vcombine.high %v320, %v320
        %v328 = vsel %vm323, %v320, 0.0
        %v329 = vsel %vm324, %v326, 0.0
        %v330 = vld [vmem:[%s283] sm:$0x3]
        %v331 = vunpack.c.l.b16 %v330
        %vm332 = vcmask 1043456
        %v333 = vsel %vm332, %v328, -inf
        %v334 = vrot.slane %v333, 4
        %v335 = vmax.f32 %v333, %v334
        %v336 = vrot.slane %v335, 2
        %v337 = vmax.f32 %v335, %v336
        %v338 = vrot.slane %v337, 1
        %v339 = vmax.f32 %v337, %v338
        %v340 = vsel %vm332, %v329, -inf
        %v341 = vrot.slane %v340, 4
        %v342 = vmax.f32 %v340, %v341
        %v343 = vrot.slane %v342, 2
        %v344 = vmax.f32 %v342, %v343
        %v345 = vrot.slane %v344, 1
        %v346 = vmax.f32 %v344, %v345
        %v347 = vsub.f32 %v328, %v339
        %v348 = vsub.f32 %v329, %v346
        %v349 = vmul.f32 %v347, 1.442695
        %v350 = vpow.pop %v349
        %v351 = vmul.f32 %v348, 1.442695
        %v352 = vpow.pop %v351
        %v353 = vsel %vm332, %v350, 0.0
        %v354 = vrot.slane %v353, 4
        %v355 = vadd.f32 %v353, %v354
        %v356 = vrot.slane %v355, 2
        %v357 = vadd.f32 %v355, %v356
        %v358 = vrot.slane %v357, 1
        %v359 = vadd.f32 %v357, %v358
        %v360 = vsel %vm332, %v352, 0.0
        %v361 = vrot.slane %v360, 4
        %v362 = vadd.f32 %v360, %v361
        %v363 = vrot.slane %v362, 2
        %v364 = vadd.f32 %v362, %v363
        %v365 = vrot.slane %v364, 1
        %v366 = vadd.f32 %v364, %v365
        %v367 = vlog2.pop %v359
        %v368 = vmul.f32 %v367, 0.6931472
        %v369 = vlog2.pop %v366
        %v370 = vmul.f32 %v369, 0.6931472
        %v371 = vadd.f32 %v368, %v339
        %v372 = vadd.f32 %v370, %v346
        %v373 = vlaneseq
        %v374 = vshrl.u32 %v373, 7
        %v375 = vlaneseq
        %v376 = vshrl.u32 %v375, 7
        %v377 = vsub.s32 0, %v376
        %v378 = vrot.slane %v331, %v377
        %v379 = vlaneseq
        %v380 = vshrl.u32 %v379, 7
        %v381 = vsub.s32 2, %v380
        %v382 = vrot.slane %v331, %v381
        %v383 = vlaneseq
        %v384 = vshrl.u32 %v383, 7
        %v385 = vsub.s32 0, %v384
        %v386 = vrot.slane %v378, %v385
        %v387 = vlaneseq
        %v388 = vshrl.u32 %v387, 7
        %v389 = vsub.s32 0, %v388
        %v390 = vrot.slane %v382, %v389
        %vm391 = vcmp.eq.s32.totalorder %v374, %v386
        %vm392 = vcmp.eq.s32.totalorder %v374, %v390
        %v393 = vsel %vm391, %v328, 0.0
        %v394 = vsel %vm392, %v329, 0.0
        %v395 = vsel %vm332, %v393, 0.0
        %v396 = vrot.slane %v395, 4
        %v397 = vadd.f32 %v395, %v396
        %v398 = vrot.slane %v397, 2
        %v399 = vadd.f32 %v397, %v398
        %v400 = vrot.slane %v399, 1
        %v401 = vadd.f32 %v399, %v400
        %v402 = vsel %vm332, %v394, 0.0
        %v403 = vrot.slane %v402, 4
        %v404 = vadd.f32 %v402, %v403
        %v405 = vrot.slane %v404, 2
        %v406 = vadd.f32 %v404, %v405
        %v407 = vrot.slane %v406, 1
        %v408 = vadd.f32 %v406, %v407
        %vm409 = vcmp.ne.s32.totalorder %v331, 4294967295
        %v410 = vsel %vm409, 1, 0
        %v411 = vlaneseq
        %v412 = vshrl.u32 %v411, 7
        %v413 = vsub.s32 0, %v412
        %v414 = vrot.slane %v410, %v413
        %v415 = vlaneseq
        %v416 = vshrl.u32 %v415, 7
        %v417 = vsub.s32 2, %v416
        %v418 = vrot.slane %v410, %v417
        %vm419 = vcmp.ne.s32.totalorder %v414, 0
        %vm420 = vcmp.ne.s32.totalorder %v418, 0
        %vm421 = vmand %vm318, %vm419
        %vm422 = vmand %vm319, %vm420
        %v423 = vld [vmem:[#allocation2] sm:$0x3]
        %v424 = vsub.f32 %v371, %v401
        %v425 = vsub.f32 %v372, %v408
        %v426 = vsel %vm421, %v424, 0.0
        %v427 = vsel %vm422, %v425, 0.0
        %v430 = vcombine.low %v426, %v427
        %v432 = vunpack.c.l.s4 1966171168
        %v433 = vunpack.c.0.s8 %v432
        %v434 = vlaneseq
        %v435 = vshrl.u32 %v434, 7
        %v436 = vsub.s32 %v433, %v435
        %v437 = vrot.slane %v430, %v436
        %v439 = vunpack.c.l.s4 1966171168
        %v440 = vunpack.c.0.s8 %v439
        %v441 = vlaneseq
        %v442 = vshrl.u32 %v441, 7
        %v443 = vsub.s32 %v440, %v442
        %v444 = vrot.slane %v437, %v443
        %v446 = vadd.f32 %v423, %v444
        %v447 = vlaneseq
        %vm448 = vcmp.ge.s32.totalorder %v447, 0
        %vm449 = vcmp.lt.s32.totalorder %v447, 256
        %vm450 = vmand %vm448, %vm449
        %451 = vst.msk [vmem:[#allocation2] sm:$0x3] %vm450, %v446
        %v452 = vld [vmem:[#allocation3] sm:$0x3]
        %v453 = vsel %vm421, 1, 0
        %v454 = vsel %vm422, 1, 0
        %v455 = vcvt.s32.f32 %v453
        %v456 = vcvt.s32.f32 %v454
        %v459 = vcombine.low %v455, %v456
        %v461 = vunpack.c.l.s4 1966171168
        %v462 = vunpack.c.0.s8 %v461
        %v463 = vlaneseq
        %v464 = vshrl.u32 %v463, 7
        %v465 = vsub.s32 %v462, %v464
        %v466 = vrot.slane %v459, %v465
        %v468 = vunpack.c.l.s4 1966171168
        %v469 = vunpack.c.0.s8 %v468
        %v470 = vlaneseq
        %v471 = vshrl.u32 %v470, 7
        %v472 = vsub.s32 %v469, %v471
        %v473 = vrot.slane %v466, %v472
        %v475 = vadd.f32 %v452, %v473
        %476 = vst.msk [vmem:[#allocation3] sm:$0x3] %vm450, %v475
        // Predicated region
        $region37: #{tpu_custom_call.1} parent=27 // pred_check
          %p477 = pneg %p300
        $region38: #{tpu_custom_call.1} parent=27 // pred_check_branch
          %479 = sbr.rel (%p477) target = $region40
        $region39: #{tpu_custom_call.1} parent=27 // pred_region
          %v480 = vld [vmem:[#allocation2] sm:$0x3]
          %v482 = vlaneseq
          %v483 = vshrl.u32 %v482, 7
          %v484 = vsub.s32 0, %v483
          %v485 = vrot.slane %v480, %v484
          %v486 = vlaneseq
          %v487 = vshrl.u32 %v486, 7
          %v488 = vsub.s32 1, %v487
          %v489 = vrot.slane %v480, %v488
          %vm492 = vcmask 1040384
          %v493 = vsel %vm492, %v485, 0.0
          %v494 = vsel %vm492, %v489, 0.0
          %v495 = vadd.f32 %v493, %v494
          %496 = vadd.xlane.f32.xlu0 %v495
          %v497 = vpop.xlane.xlu0 %496
          %v498 = vrot.slane %v497, 4
          %v499 = vadd.f32 %v497, %v498
          %v500 = vrot.slane %v499, 2
          %v501 = vadd.f32 %v499, %v500
          %v502 = vrot.slane %v501, 1
          %v503 = vadd.f32 %v501, %v502
          %s504 = vtos %v503
          %v505 = vstv %s504
          %vm506 = vcmask 0
          %507 = vst.msk [vmem:[%s293] sm:$0x1] %vm506, %v505
          %v508 = vld [vmem:[#allocation3] sm:$0x3]
          %v510 = vlaneseq
          %v511 = vshrl.u32 %v510, 7
          %v512 = vsub.s32 0, %v511
          %v513 = vrot.slane %v508, %v512
          %v514 = vlaneseq
          %v515 = vshrl.u32 %v514, 7
          %v516 = vsub.s32 1, %v515
          %v517 = vrot.slane %v508, %v516
          %v520 = vsel %vm492, %v513, 0.0
          %v521 = vsel %vm492, %v517, 0.0
          %v522 = vadd.f32 %v520, %v521
          %523 = vadd.xlane.f32.xlu0 %v522
          %v524 = vpop.xlane.xlu0 %523
          %v525 = vrot.slane %v524, 4
          %v526 = vadd.f32 %v524, %v525
          %v527 = vrot.slane %v526, 2
          %v528 = vadd.f32 %v526, %v527
          %v529 = vrot.slane %v528, 1
          %v530 = vadd.f32 %v528, %v529
          %s531 = vtos %v530
          %v532 = vstv %s531
          %533 = vst.msk [vmem:[%s299] sm:$0x1] %vm506, %v532
        $region40: #{tpu_custom_call.1} parent=27 // pred_fallthru
          _
        %p534 = scmp.lt.s32.totalorder %s23, 1
        %s535 = scalar_select %p534, %s23, 1
        %p536 = scmp.lt.s32.totalorder %s24, 0
        %s537 = scalar_select %p536, %s24, 0
        %s538 = sadd.s32 %s537, %s535
        %s539 = scalar_lea.vmem %s2, %s538
        %p540 = scmp.lt.s32.totalorder %s23, 1
        %s541 = scalar_select %p540, %s23, 1
        %p542 = scmp.lt.s32.totalorder %s24, 0
        %s543 = scalar_select %p542, %s24, 0
        %s544 = sadd.s32 %s543, %s541
        %s545 = scalar_lea.vmem %s3, %s544
        // Predicated region
        $region41: #{tpu_custom_call.1} parent=27 // pred_check
          %p546 = pneg %p125
        $region42: #{tpu_custom_call.1} parent=27 // pred_check_branch
          %548 = sbr.rel (%p546) target = $region44
        $region43: #{tpu_custom_call.1} parent=27 // pred_region
          _
        $region44: #{tpu_custom_call.1} parent=27 // pred_fallthru
          _
        // Predicated region
        $region45: #{tpu_custom_call.1} parent=27 // pred_check
          %p549 = pneg %p153
        $region46: #{tpu_custom_call.1} parent=27 // pred_check_branch
          %551 = sbr.rel (%p549) target = $region48
        $region47: #{tpu_custom_call.1} parent=27 // pred_region
          _
        $region48: #{tpu_custom_call.1} parent=27 // pred_fallthru
          _
      $region28: #{tpu_custom_call.1} parent=5 // pred_fallthru
        _
      %p552 = scmp.le.s32.totalorder 2, %s13
      // Predicated region
      $region49: #{tpu_custom_call.1} parent=5 // pred_check
        %p553 = pneg %p552
      $region50: #{tpu_custom_call.1} parent=5 // pred_check_branch
        %555 = sbr.rel (%p553) target = $region52
      $region51: #{tpu_custom_call.1} parent=5 // pred_region
        %s556 = ssub.s32 %s13, 2
        // Predicated region
        $region53: #{tpu_custom_call.1} parent=51 // pred_check
          %p557 = pneg %p131
        $region54: #{tpu_custom_call.1} parent=51 // pred_check_branch
          %559 = sbr.rel (%p557) target = $region56
        $region55: #{tpu_custom_call.1} parent=51 // pred_region
          %p560 = scmp.lt.s32.totalorder %s26, 1
          %s561 = scalar_select %p560, %s26, 1
          %p562 = scmp.lt.s32.totalorder %s27, 0
          %s563 = scalar_select %p562, %s27, 0
          %s564 = sadd.s32 %s563, %s561
          %s565 = scalar_lea.vmem %s2, %s564
        $region56: #{tpu_custom_call.1} parent=51 // pred_fallthru
          _
        // Predicated region
        $region57: #{tpu_custom_call.1} parent=51 // pred_check
          %p566 = pneg %p159
        $region58: #{tpu_custom_call.1} parent=51 // pred_check_branch
          %568 = sbr.rel (%p566) target = $region60
        $region59: #{tpu_custom_call.1} parent=51 // pred_region
          %p569 = scmp.lt.s32.totalorder %s26, 1
          %s570 = scalar_select %p569, %s26, 1
          %p571 = scmp.lt.s32.totalorder %s27, 0
          %s572 = scalar_select %p571, %s27, 0
          %s573 = sadd.s32 %s572, %s570
          %s574 = scalar_lea.vmem %s3, %s573
        $region60: #{tpu_custom_call.1} parent=51 // pred_fallthru
          _
      $region52: #{tpu_custom_call.1} parent=5 // pred_fallthru
        _
    $region6: #{tpu_custom_call.1} parent=1 // loop_footer
      %s17 = sadd.s32 1, %s13
    $region7: #{tpu_custom_call.1} parent=1 // loop_footer_branch
      %12 = sbr.rel target = $region3
    $region8: #{tpu_custom_call.1} parent=1 // loop_exit
      _
    %575 = vsyncpa [#allocation5], 1
    %s576 = scalar_lea.sflag [#allocation5], 1
    %577 = vsyncpa %s576, 1

</llo_original>
